<compile_context>
chip_gen: v7x
topology: tpu7x:2x2x1
jax: 0.10.0
libtpu: 0.0.40
codegen_flags: <defaults>
</compile_context>

<pallas_src>
import math

import jax
import jax.numpy as jnp
from jax.experimental import pallas as pl
from jax.experimental.pallas import tpu as pltpu


_MIN_GRID_STEPS = 4          # keep the parallel row axis shardable across 2 TCs (v7x)
_VMEM_HEADROOM = 2 * 1024 * 1024
_D_PACK_CAP = 8192           # cap on packed row width (bounds the resident E matrix)


def _vmem_capacity_bytes() -> int:
    try:
        info = pltpu.get_tpu_info()
        cap = getattr(info, "vmem_capacity_bytes", None)
        if cap:
            return int(cap)
    except Exception:
        pass
    return 64 * 1024 * 1024   # conservative fallback (v7x-sized)


def _budgets():
    cap = _vmem_capacity_bytes()
    vmem_limit = min(64 * 1024 * 1024, (cap * 3) // 4)   # 128MiB -> 64MiB, 64MiB -> 48MiB
    target_block = min(16 * 1024 * 1024, vmem_limit // 4)  # 16MiB (v5e/v6e), 12MiB (v7x)
    return vmem_limit, target_block


def _choose_bm(n_rows, out_row_bytes, in_row_padded_bytes, resident_bytes,
               vmem_limit_bytes, target_block_bytes, row_align):
    """Rows per block: fill the per-step target, but budget the *lane-padded*
    double-buffered footprint of both the output and input blocks against the
    scoped VMEM limit, and keep >= 2 (ideally >= 4) grid steps when possible."""
    per_row_db = 2 * (out_row_bytes + in_row_padded_bytes)      # x2 for double-buffering
    avail = max(vmem_limit_bytes - resident_bytes - _VMEM_HEADROOM,
                per_row_db * row_align)
    bm_vmem = avail // per_row_db
    bm_tgt = max(row_align, target_block_bytes // max(out_row_bytes, 1))
    bm = min(bm_vmem, bm_tgt)
    if n_rows > row_align:
        steps = _MIN_GRID_STEPS if n_rows > row_align * _MIN_GRID_STEPS else 2
        bm = min(bm, pl.cdiv(n_rows, steps))
    if bm >= n_rows:
        return n_rows                                   # full extent is always legal
    return max(row_align, (bm // row_align) * row_align)


def _packed_dot_kernel(x_ref, e_ref, o_ref):
    # x_ref: (bm, kp)   e_ref: (kp, kp*d_model)   o_ref: (bm, kp*d_model)
    # E is block-diagonal (E[j, j*d_model + d] = w[d]); one MXU matmul per block
    # keeps the kernel store-bound (vmatmul issues on the vector-extended slot).
    o_ref[...] = jnp.dot(x_ref[...], e_ref[...],
                         preferred_element_type=jnp.float32).astype(o_ref.dtype)


def _packed_vpu_kernel(x_ref, e_ref, o_ref):
    # Small pack factors (< 8 terms): cheap VPU lane-broadcast multiply-accumulate.
    kp = x_ref.shape[1]
    acc = x_ref[:, 0:1] * e_ref[0:1, :]
    for j in range(1, kp):
        acc = acc + x_ref[:, j:j + 1] * e_ref[j:j + 1, :]
    o_ref[...] = acc.astype(o_ref.dtype)


def _simple_kernel(x_ref, w_ref, o_ref):
    # x_ref: (bm, 1)   w_ref: (1, tn)   o_ref: (bm, tn)
    o_ref[...] = (x_ref[...] * w_ref[...]).astype(o_ref.dtype)


def float_value_embedding(x: jax.Array, weight: jax.Array) -> jax.Array:
    """Equivalent of nn.Linear(1, d_model, bias=False)(x.unsqueeze(-1)).

    x: arbitrary-shape float array; weight: (d_model, 1) as stored by nn.Linear.
    Returns array of shape x.shape + (d_model,).
    """
    d_model = weight.shape[0]
    out_dtype = jnp.result_type(x.dtype, weight.dtype)
    itemsize = jnp.dtype(out_dtype).itemsize
    orig_shape = x.shape
    n = int(math.prod(orig_shape))

    if n == 0:
        return jnp.zeros((*orig_shape, d_model), out_dtype)

    vmem_limit, target_bytes = _budgets()
    row_align = max(8, 32 // itemsize)          # 8 (f32) / 16 (bf16) / 32 (int8, fp8)

    w_row = weight.reshape(1, d_model).astype(out_dtype)
    x_flat = x.reshape(-1).astype(out_dtype)

    if d_model % 128 == 0:
        # Already lane-dense: broadcast outer product with full-row contiguous output
        # tiles (one contiguous DMA per bm rows on the store path).
        if row_align * d_model * itemsize <= target_bytes:
            tn = d_model
        else:
            # Huge d_model: strip columns (largest 128-multiple divisor under the cap).
            col_cap = max(128, (target_bytes // (row_align * itemsize)) // 128 * 128)
            tn = 128
            for cand in range(min(col_cap, d_model), 127, -128):
                if d_model % cand == 0:
                    tn = cand
                    break
        in_row_pad = 128 * itemsize                     # (bm,1) x block lane-pads to (bm,128)
        resident = 2 * 8 * tn * itemsize                # (1,tn) w block pads to (8,tn)
        bm = _choose_bm(n, tn * itemsize, in_row_pad, resident,
                        vmem_limit, target_bytes, row_align)

        out = pl.pallas_call(
            _simple_kernel,
            out_shape=jax.ShapeDtypeStruct((n, d_model), out_dtype),
            grid_spec=pltpu.PrefetchScalarGridSpec(
                num_scalar_prefetch=0,
                grid=(pl.cdiv(n, bm), d_model // tn),
                in_specs=[
                    pl.BlockSpec((bm, 1), lambda i, j: (i, 0)),
                    pl.BlockSpec((1, tn), lambda i, j: (0, j)),
                ],
                out_specs=pl.BlockSpec((bm, tn), lambda i, j: (i, j)),
            ),
            compiler_params=pltpu.CompilerParams(
                dimension_semantics=("parallel", "parallel"),
                vmem_limit_bytes=vmem_limit,
            ),
        )(x_flat.reshape(n, 1), w_row)
        return out.reshape(*orig_shape, d_model)

    # Lane-dense packing: kp consecutive input values share one output row of width
    # kp*d_model (a multiple of 128) so every store is an unmasked full-lane vst.
    base_k = 128 // math.gcd(d_model, 128)
    d_pack_cap = max(_D_PACK_CAP, base_k * d_model)
    kps = [m * base_k for m in range(1, 128 // base_k + 1)
           if m * base_k * d_model <= d_pack_cap]
    kp_exact = [k for k in kps if n % k == 0]
    kp = max(kp_exact) if kp_exact else max(kps)        # prefer no-pad, widest rows
    d_packed = kp * d_model

    pad = (-n) % kp
    if pad:
        # Padding a handful of inputs + trimming beats demoting every store to a
        # masked narrow vst (measured ~4.5x store-path penalty).
        x_flat = jnp.concatenate([x_flat, jnp.zeros((pad,), out_dtype)])
    n_pad = n + pad
    rows = n_pad // kp

    # Block-diagonal expansion of the weight row: E[j, j*d_model + d] = w[d].
    e_mat = jnp.kron(jnp.eye(kp, dtype=out_dtype), w_row)

    in_row_pad = ((kp + 127) // 128) * 128 * itemsize           # lane-padded x block row
    resident = 2 * (((kp + 7) // 8) * 8) * d_packed * itemsize  # padded E, double-buffered
    bm = _choose_bm(rows, d_packed * itemsize, in_row_pad, resident,
                    vmem_limit, target_bytes, row_align)

    kernel = _packed_dot_kernel if kp >= 8 else _packed_vpu_kernel
    out_packed = pl.pallas_call(
        kernel,
        out_shape=jax.ShapeDtypeStruct((rows, d_packed), out_dtype),
        grid_spec=pltpu.PrefetchScalarGridSpec(
            num_scalar_prefetch=0,
            grid=(pl.cdiv(rows, bm),),
            in_specs=[
                pl.BlockSpec((bm, kp), lambda i: (i, 0)),
                pl.BlockSpec((kp, d_packed), lambda i: (0, 0)),
            ],
            out_specs=pl.BlockSpec((bm, d_packed), lambda i: (i, 0)),
        ),
        compiler_params=pltpu.CompilerParams(
            dimension_semantics=("parallel",),
            vmem_limit_bytes=vmem_limit,
        ),
    )(x_flat.reshape(rows, kp), e_mat)

    # (rows, kp*d_model) is row-major identical to (n_pad, d_model): free reshape.
    out = out_packed.reshape(n_pad, d_model)
    if pad:
        out = out[:n]
    return out.reshape(*orig_shape, d_model)


if __name__ == "__main__":
    d_model = 32
    B, S = 2, 16  # x has shape (B, S) of float values

    key = jax.random.PRNGKey(0)
    kx, kw = jax.random.split(key)

    x = jax.random.normal(kx, (B, S), dtype=jnp.float32)
    # nn.Linear(1, d_model) weight shape: (d_model, 1); deterministic init.
    bound = 1.0  # kaiming-uniform bound with fan_in=1
    weight = jax.random.uniform(kw, (d_model, 1), dtype=jnp.float32,
                                minval=-bound, maxval=bound)

    y = float_value_embedding(x, weight)
    y = jax.block_until_ready(y)

    # Reference check against plain-JAX equivalent of the PyTorch forward.
    y_ref = x[..., None] * weight[:, 0]
    assert y.shape == (B, S, d_model), y.shape
    assert jnp.allclose(y, y_ref, atol=1e-6, rtol=1e-6), float(jnp.max(jnp.abs(y - y_ref)))

    print("KERNEL_OK")
</pallas_src>

<mosaic_0001>
module attributes {stable_mosaic.version = 11 : i64} {
  func.func @_packed_dot_kernel(%arg0: i32, %arg1: memref<1x32xf32, #tpu.memory_space<vmem>>, %arg2: memref<32x1024xf32, #tpu.memory_space<vmem>>, %arg3: memref<1x1024xf32, #tpu.memory_space<vmem>>) attributes {dimension_semantics = [#tpu.dimension_semantics<parallel>], iteration_bounds = array<i64: 1>, scalar_prefetch = 0 : i64, scratch_operands = 0 : i64, tpu.core_type = #tpu.core_type<tc>, window_params = [{transform_indices = @transform_0, window_bounds = array<i64: 1, 32>}, {pipeline_mode = #tpu.pipeline_mode<synchronous>, transform_indices = @transform_1, window_bounds = array<i64: 32, 1024>}, {transform_indices = @transform_2, window_bounds = array<i64: 1, 1024>}]} {
    %c0 = arith.constant 0 : index
    %c0_0 = arith.constant 0 : index
    %0 = vector.load %arg1[%c0, %c0_0] : memref<1x32xf32, #tpu.memory_space<vmem>>, vector<1x32xf32>
    %c0_1 = arith.constant 0 : index
    %c0_2 = arith.constant 0 : index
    %1 = vector.load %arg2[%c0_1, %c0_2] : memref<32x1024xf32, #tpu.memory_space<vmem>>, vector<32x1024xf32>
    %cst = arith.constant dense<0.000000e+00> : vector<1x1024xf32>
    %2 = tpu.matmul %0, %1, %cst {dimension_numbers = #tpu.dot_dimension_numbers<[1], [0], [0], [1], [0, 0, 1, 1], [], []>} : vector<1x32xf32>, vector<32x1024xf32>, vector<1x1024xf32> -> vector<1x1024xf32>
    %c0_3 = arith.constant 0 : index
    %c0_4 = arith.constant 0 : index
    %3 = vector.load %arg3[%c0_3, %c0_4] : memref<1x1024xf32, #tpu.memory_space<vmem>>, vector<1x1024xf32>
    tpu.vector_store %arg3[%c0_3, %c0_4], %2 {strides = array<i32>} : memref<1x1024xf32, #tpu.memory_space<vmem>>, vector<1x1024xf32>,
    return
  }
  func.func @transform_0(%arg0: i32) -> (i32, i32) {
    %c0_i32 = arith.constant 0 : i32
    %c0_i32_0 = arith.constant 0 : i32
    return %arg0, %c0_i32 : i32, i32
  }
  func.func @transform_1(%arg0: i32) -> (i32, i32) {
    %c0_i32 = arith.constant 0 : i32
    %c0_i32_0 = arith.constant 0 : i32
    %c0_i32_1 = arith.constant 0 : i32
    return %c0_i32, %c0_i32_0 : i32, i32
  }
  func.func @transform_2(%arg0: i32) -> (i32, i32) {
    %c0_i32 = arith.constant 0 : i32
    %c0_i32_0 = arith.constant 0 : i32
    return %arg0, %c0_i32 : i32, i32
  }
}

</mosaic_0001>

<llo_original>
// kernel: tpu_custom_call.1
$region0: #{tpu_custom_call.1}
  #allocation0 [shape = 'u32[]', space=smem, size = 0x4, offset = 0x4, fixed_abs, tag = 'smem constant byte address 0x4 - core index']
  #allocation1 [shape = 'u32[144,128]{1,0:T(1,128)}', space=vmem, size = 0x12000, scoped, tag = 'internal scratch']
  %s0 = inlined_call_operand.hbm [shape: f32[1,32], index: 0, kind: input, shape index: {}]
  %s1 = inlined_call_operand.hbm [shape: f32[32,1024], index: 1, kind: input, shape index: {}]
  %s2 = inlined_call_operand.hbm [shape: f32[1,1024], index: 2, kind: output, shape index: {}]
  %s3 = sld [smem:[#allocation0]]
  $region26: #{tpu_custom_call.1} parent=0
    _
  %s5 = ssub.s32 1, %s3
  %s6 = scalar_select 0, %s5, %s3
  $region1: #{tpu_custom_call.1} parent=0
    #allocation2 [shape = 'u8[512]{0}', space=vmem, size = 0x400, scoped, tag = 'input window, operand 0, single buffered']
    #allocation3 [shape = 's32[1]{0}', space=sflag, size = 0x4, scoped, tag = 'scoped memory for tpu_custom_call.1']
    #allocation4 [shape = 's32[1]{0}', space=sflag, size = 0x4, scoped, tag = 'scoped memory for tpu_custom_call.1']
    #allocation5 [shape = 'u8[131072]{0}', space=vmem, size = 0x20000, scoped, tag = 'input window, operand 1, single buffered']
    #allocation6 [shape = 's32[1]{0}', space=sflag, size = 0x4, scoped, tag = 'scoped memory for tpu_custom_call.1']
    #allocation7 [shape = 'u8[4096]{0}', space=vmem, size = 0x1000, scoped, tag = 'output window, operand 0, single buffered']
    %7 = vsyncpa [#allocation3], 0
    %8 = vsyncpa [#allocation6], 0
    %9 = vsyncpa [#allocation4], 0
    // Predicated region
    $region2: #{tpu_custom_call.1} parent=1 // pred_check
      _
    $region3: #{tpu_custom_call.1} parent=1 // pred_check_branch
      %11 = sbr.rel (0) target = $region5
    $region4: #{tpu_custom_call.1} parent=1 // pred_region
      %s13 = ssub.s32 16, 16
      %14 = vsyncadd [#allocation3], %s13
      %s16 = sshll.u32 [#allocation2], 4
      %s17 = int_to_ptr.vmem [resolvable:$true] %s16
      %19 = dma.hbm_to_vmem [thread:$0]  %s0, 16, %s17, [#allocation3]
    $region5: #{tpu_custom_call.1} parent=1 // pred_fallthru
      _
    // Predicated region
    $region6: #{tpu_custom_call.1} parent=1 // pred_check
      _
    $region7: #{tpu_custom_call.1} parent=1 // pred_check_branch
      %21 = sbr.rel (0) target = $region9
    $region8: #{tpu_custom_call.1} parent=1 // pred_region
      %s23 = ssub.s32 4096, 4096
      %24 = vsyncadd [#allocation6], %s23
      %s25 = sshll.u32 [#allocation5], 4
      %s26 = int_to_ptr.vmem [resolvable:$true] %s25
      %31 = dma.hbm_to_vmem [thread:$0]  %s1, 4096, %s26, [#allocation6], 1024, 1024, 64
    $region9: #{tpu_custom_call.1} parent=1 // pred_fallthru
      _
    // Predicated region
    $region10: #{tpu_custom_call.1} parent=1 // pred_check
      _
    $region11: #{tpu_custom_call.1} parent=1 // pred_check_branch
      %33 = sbr.rel (0) target = $region13
    $region12: #{tpu_custom_call.1} parent=1 // pred_region
      %34 = dma.done [#allocation3], 16
    $region13: #{tpu_custom_call.1} parent=1 // pred_fallthru
      _
    // Predicated region
    $region14: #{tpu_custom_call.1} parent=1 // pred_check
      _
    $region15: #{tpu_custom_call.1} parent=1 // pred_check_branch
      %36 = sbr.rel (0) target = $region17
    $region16: #{tpu_custom_call.1} parent=1 // pred_region
      %37 = dma.done [#allocation6], 4096
    $region17: #{tpu_custom_call.1} parent=1 // pred_fallthru
      _
    %v38 = vld [vmem:[#allocation2] sm:$0x1]
    %v39 = vld [vmem:[#allocation5] sm:$0xff]
    %v40 = vld [vmem:[#allocation5 + $0x8] sm:$0xff]
    %v41 = vld [vmem:[#allocation5 + $0x10] sm:$0xff]
    %v42 = vld [vmem:[#allocation5 + $0x18] sm:$0xff]
    %v43 = vld [vmem:[#allocation5 + $0x20] sm:$0xff]
    %v44 = vld [vmem:[#allocation5 + $0x28] sm:$0xff]
    %v45 = vld [vmem:[#allocation5 + $0x30] sm:$0xff]
    %v46 = vld [vmem:[#allocation5 + $0x38] sm:$0xff]
    %v47 = vld [vmem:[#allocation5 + $0x40] sm:$0xff]
    %v48 = vld [vmem:[#allocation5 + $0x48] sm:$0xff]
    %v49 = vld [vmem:[#allocation5 + $0x50] sm:$0xff]
    %v50 = vld [vmem:[#allocation5 + $0x58] sm:$0xff]
    %v51 = vld [vmem:[#allocation5 + $0x60] sm:$0xff]
    %v52 = vld [vmem:[#allocation5 + $0x68] sm:$0xff]
    %v53 = vld [vmem:[#allocation5 + $0x70] sm:$0xff]
    %v54 = vld [vmem:[#allocation5 + $0x78] sm:$0xff]
    %v55 = vld [vmem:[#allocation5 + $0x80] sm:$0xff]
    %v56 = vld [vmem:[#allocation5 + $0x88] sm:$0xff]
    %v57 = vld [vmem:[#allocation5 + $0x90] sm:$0xff]
    %v58 = vld [vmem:[#allocation5 + $0x98] sm:$0xff]
    %v59 = vld [vmem:[#allocation5 + $0xa0] sm:$0xff]
    %v60 = vld [vmem:[#allocation5 + $0xa8] sm:$0xff]
    %v61 = vld [vmem:[#allocation5 + $0xb0] sm:$0xff]
    %v62 = vld [vmem:[#allocation5 + $0xb8] sm:$0xff]
    %v63 = vld [vmem:[#allocation5 + $0xc0] sm:$0xff]
    %v64 = vld [vmem:[#allocation5 + $0xc8] sm:$0xff]
    %v65 = vld [vmem:[#allocation5 + $0xd0] sm:$0xff]
    %v66 = vld [vmem:[#allocation5 + $0xd8] sm:$0xff]
    %v67 = vld [vmem:[#allocation5 + $0xe0] sm:$0xff]
    %v68 = vld [vmem:[#allocation5 + $0xe8] sm:$0xff]
    %v69 = vld [vmem:[#allocation5 + $0xf0] sm:$0xff]
    %v70 = vld [vmem:[#allocation5 + $0xf8] sm:$0xff]
    %vm71 = vcmask 261120
    %v73 = vsel %vm71, %v38, 0
    %75 = vmatprep.subr.mxu0 %v40
    %76 = vmatpush1.msra.mxu0 %v39
    %77 = vmatprep.subr.mxu0 %v48
    %78 = vmatpush1.msra.mxu0 %v47
    %79 = vmatprep.subr.mxu0 %v56
    %80 = vmatpush1.msra.mxu0 %v55
    %81 = vmatprep.subr.mxu0 %v64
    %82 = vmatpush1.msra.mxu0 %v63
    %83 = vmatprep.subr.mxu0 0.0
    %84 = vmatpush1.msra.mxu0 0.0
    %85 = vmatprep.subr.mxu0 0.0
    %86 = vmatpush1.msra.mxu0 0.0
    %87 = vmatprep.subr.mxu0 0.0
    %88 = vmatpush1.msra.mxu0 0.0
    %89 = vmatprep.subr.mxu0 0.0
    %90 = vmatpush1.msra.mxu0 0.0
    %91 = vmatprep.subr.mxu0 0.0
    %92 = vmatpush1.msra.mxu0 0.0
    %93 = vmatprep.subr.mxu0 0.0
    %94 = vmatpush1.msra.mxu0 0.0
    %95 = vmatprep.subr.mxu0 0.0
    %96 = vmatpush1.msra.mxu0 0.0
    %97 = vmatprep.subr.mxu0 0.0
    %98 = vmatpush1.msra.mxu0 0.0
    %99 = vmatprep.subr.mxu0 0.0
    %100 = vmatpush1.msra.mxu0 0.0
    %101 = vmatprep.subr.mxu0 0.0
    %102 = vmatpush1.msra.mxu0 0.0
    %103 = vmatprep.subr.mxu0 0.0
    %104 = vmatpush1.msra.mxu0 0.0
    %105 = vmatprep.subr.mxu0 0.0
    %106 = vmatpush1.msra.mxu0 0.0
    %107 = vmatprep.subr.mxu0 0.0
    %108 = vmatpush1.msra.mxu0 0.0
    %109 = vmatprep.subr.mxu0 0.0
    %110 = vmatpush1.msra.mxu0 0.0
    %111 = vmatprep.subr.mxu0 0.0
    %112 = vmatpush1.msra.mxu0 0.0
    %113 = vmatprep.subr.mxu0 0.0
    %114 = vmatpush1.msra.mxu0 0.0
    %115 = vmatprep.subr.mxu0 0.0
    %116 = vmatpush1.msra.mxu0 0.0
    %117 = vmatprep.subr.mxu0 0.0
    %118 = vmatpush1.msra.mxu0 0.0
    %119 = vmatprep.subr.mxu0 0.0
    %120 = vmatpush1.msra.mxu0 0.0
    %121 = vmatprep.subr.mxu0 0.0
    %122 = vmatpush1.msra.mxu0 0.0
    %123 = vmatprep.subr.mxu0 0.0
    %124 = vmatpush1.msra.mxu0 0.0
    %125 = vmatprep.subr.mxu0 0.0
    %126 = vmatpush1.msra.mxu0 0.0
    %127 = vmatprep.subr.mxu0 0.0
    %128 = vmatpush1.msra.mxu0 0.0
    %129 = vmatprep.subr.mxu0 0.0
    %130 = vmatpush1.msra.mxu0 0.0
    %131 = vmatprep.subr.mxu0 0.0
    %132 = vmatpush1.msra.mxu0 0.0
    %133 = vmatprep.subr.mxu0 0.0
    %134 = vmatpush1.msra.mxu0 0.0
    %135 = vmatprep.subr.mxu0 0.0
    %136 = vmatpush1.msra.mxu0 0.0
    %137 = vmatprep.subr.mxu0 0.0
    %138 = vmatpush1.msra.mxu0 0.0
    %139 = vmatprep.mubr.f32.mxu0 0.0
    %140 = vmatmul.mubr.f32.gmra.mrb[0].mxu0 %v73
    %v141 = vpop.f32.mrb[0].mxu0
    %v142 = vadd.f32 0.0, %v141
    %v143 = vpop.f32.mrb[0].mxu0
    %v144 = vadd.f32 0.0, %v143
    %145 = vdwg.mxu0
    %146 = vmatprep.subr.mxu0 %v42
    %147 = vmatpush1.msra.mxu0 %v41
    %148 = vmatprep.subr.mxu0 %v50
    %149 = vmatpush1.msra.mxu0 %v49
    %150 = vmatprep.subr.mxu0 %v58
    %151 = vmatpush1.msra.mxu0 %v57
    %152 = vmatprep.subr.mxu0 %v66
    %153 = vmatpush1.msra.mxu0 %v65
    %154 = vmatprep.subr.mxu0 0.0
    %155 = vmatpush1.msra.mxu0 0.0
    %156 = vmatprep.subr.mxu0 0.0
    %157 = vmatpush1.msra.mxu0 0.0
    %158 = vmatprep.subr.mxu0 0.0
    %159 = vmatpush1.msra.mxu0 0.0
    %160 = vmatprep.subr.mxu0 0.0
    %161 = vmatpush1.msra.mxu0 0.0
    %162 = vmatprep.subr.mxu0 0.0
    %163 = vmatpush1.msra.mxu0 0.0
    %164 = vmatprep.subr.mxu0 0.0
    %165 = vmatpush1.msra.mxu0 0.0
    %166 = vmatprep.subr.mxu0 0.0
    %167 = vmatpush1.msra.mxu0 0.0
    %168 = vmatprep.subr.mxu0 0.0
    %169 = vmatpush1.msra.mxu0 0.0
    %170 = vmatprep.subr.mxu0 0.0
    %171 = vmatpush1.msra.mxu0 0.0
    %172 = vmatprep.subr.mxu0 0.0
    %173 = vmatpush1.msra.mxu0 0.0
    %174 = vmatprep.subr.mxu0 0.0
    %175 = vmatpush1.msra.mxu0 0.0
    %176 = vmatprep.subr.mxu0 0.0
    %177 = vmatpush1.msra.mxu0 0.0
    %178 = vmatprep.subr.mxu0 0.0
    %179 = vmatpush1.msra.mxu0 0.0
    %180 = vmatprep.subr.mxu0 0.0
    %181 = vmatpush1.msra.mxu0 0.0
    %182 = vmatprep.subr.mxu0 0.0
    %183 = vmatpush1.msra.mxu0 0.0
    %184 = vmatprep.subr.mxu0 0.0
    %185 = vmatpush1.msra.mxu0 0.0
    %186 = vmatprep.subr.mxu0 0.0
    %187 = vmatpush1.msra.mxu0 0.0
    %188 = vmatprep.subr.mxu0 0.0
    %189 = vmatpush1.msra.mxu0 0.0
    %190 = vmatprep.subr.mxu0 0.0
    %191 = vmatpush1.msra.mxu0 0.0
    %192 = vmatprep.subr.mxu0 0.0
    %193 = vmatpush1.msra.mxu0 0.0
    %194 = vmatprep.subr.mxu0 0.0
    %195 = vmatpush1.msra.mxu0 0.0
    %196 = vmatprep.subr.mxu0 0.0
    %197 = vmatpush1.msra.mxu0 0.0
    %198 = vmatprep.subr.mxu0 0.0
    %199 = vmatpush1.msra.mxu0 0.0
    %200 = vmatprep.subr.mxu0 0.0
    %201 = vmatpush1.msra.mxu0 0.0
    %202 = vmatprep.subr.mxu0 0.0
    %203 = vmatpush1.msra.mxu0 0.0
    %204 = vmatprep.subr.mxu0 0.0
    %205 = vmatpush1.msra.mxu0 0.0
    %206 = vmatprep.subr.mxu0 0.0
    %207 = vmatpush1.msra.mxu0 0.0
    %208 = vmatprep.subr.mxu0 0.0
    %209 = vmatpush1.msra.mxu0 0.0
    %210 = vmatprep.mubr.f32.mxu0 0.0
    %211 = vmatmul.mubr.f32.gmra.mrb[0].mxu0 %v73
    %v212 = vpop.f32.mrb[0].mxu0
    %v213 = vadd.f32 0.0, %v212
    %v214 = vpop.f32.mrb[0].mxu0
    %v215 = vadd.f32 0.0, %v214
    %216 = vdwg.mxu0
    %217 = vmatprep.subr.mxu0 %v44
    %218 = vmatpush1.msra.mxu0 %v43
    %219 = vmatprep.subr.mxu0 %v52
    %220 = vmatpush1.msra.mxu0 %v51
    %221 = vmatprep.subr.mxu0 %v60
    %222 = vmatpush1.msra.mxu0 %v59
    %223 = vmatprep.subr.mxu0 %v68
    %224 = vmatpush1.msra.mxu0 %v67
    %225 = vmatprep.subr.mxu0 0.0
    %226 = vmatpush1.msra.mxu0 0.0
    %227 = vmatprep.subr.mxu0 0.0
    %228 = vmatpush1.msra.mxu0 0.0
    %229 = vmatprep.subr.mxu0 0.0
    %230 = vmatpush1.msra.mxu0 0.0
    %231 = vmatprep.subr.mxu0 0.0
    %232 = vmatpush1.msra.mxu0 0.0
    %233 = vmatprep.subr.mxu0 0.0
    %234 = vmatpush1.msra.mxu0 0.0
    %235 = vmatprep.subr.mxu0 0.0
    %236 = vmatpush1.msra.mxu0 0.0
    %237 = vmatprep.subr.mxu0 0.0
    %238 = vmatpush1.msra.mxu0 0.0
    %239 = vmatprep.subr.mxu0 0.0
    %240 = vmatpush1.msra.mxu0 0.0
    %241 = vmatprep.subr.mxu0 0.0
    %242 = vmatpush1.msra.mxu0 0.0
    %243 = vmatprep.subr.mxu0 0.0
    %244 = vmatpush1.msra.mxu0 0.0
    %245 = vmatprep.subr.mxu0 0.0
    %246 = vmatpush1.msra.mxu0 0.0
    %247 = vmatprep.subr.mxu0 0.0
    %248 = vmatpush1.msra.mxu0 0.0
    %249 = vmatprep.subr.mxu0 0.0
    %250 = vmatpush1.msra.mxu0 0.0
    %251 = vmatprep.subr.mxu0 0.0
    %252 = vmatpush1.msra.mxu0 0.0
    %253 = vmatprep.subr.mxu0 0.0
    %254 = vmatpush1.msra.mxu0 0.0
    %255 = vmatprep.subr.mxu0 0.0
    %256 = vmatpush1.msra.mxu0 0.0
    %257 = vmatprep.subr.mxu0 0.0
    %258 = vmatpush1.msra.mxu0 0.0
    %259 = vmatprep.subr.mxu0 0.0
    %260 = vmatpush1.msra.mxu0 0.0
    %261 = vmatprep.subr.mxu0 0.0
    %262 = vmatpush1.msra.mxu0 0.0
    %263 = vmatprep.subr.mxu0 0.0
    %264 = vmatpush1.msra.mxu0 0.0
    %265 = vmatprep.subr.mxu0 0.0
    %266 = vmatpush1.msra.mxu0 0.0
    %267 = vmatprep.subr.mxu0 0.0
    %268 = vmatpush1.msra.mxu0 0.0
    %269 = vmatprep.subr.mxu0 0.0
    %270 = vmatpush1.msra.mxu0 0.0
    %271 = vmatprep.subr.mxu0 0.0
    %272 = vmatpush1.msra.mxu0 0.0
    %273 = vmatprep.subr.mxu0 0.0
    %274 = vmatpush1.msra.mxu0 0.0
    %275 = vmatprep.subr.mxu0 0.0
    %276 = vmatpush1.msra.mxu0 0.0
    %277 = vmatprep.subr.mxu0 0.0
    %278 = vmatpush1.msra.mxu0 0.0
    %279 = vmatprep.subr.mxu0 0.0
    %280 = vmatpush1.msra.mxu0 0.0
    %281 = vmatprep.mubr.f32.mxu0 0.0
    %282 = vmatmul.mubr.f32.gmra.mrb[0].mxu0 %v73
    %v283 = vpop.f32.mrb[0].mxu0
    %v284 = vadd.f32 0.0, %v283
    %v285 = vpop.f32.mrb[0].mxu0
    %v286 = vadd.f32 0.0, %v285
    %287 = vdwg.mxu0
    %288 = vmatprep.subr.mxu0 %v46
    %289 = vmatpush1.msra.mxu0 %v45
    %290 = vmatprep.subr.mxu0 %v54
    %291 = vmatpush1.msra.mxu0 %v53
    %292 = vmatprep.subr.mxu0 %v62
    %293 = vmatpush1.msra.mxu0 %v61
    %294 = vmatprep.subr.mxu0 %v70
    %295 = vmatpush1.msra.mxu0 %v69
    %296 = vmatprep.subr.mxu0 0.0
    %297 = vmatpush1.msra.mxu0 0.0
    %298 = vmatprep.subr.mxu0 0.0
    %299 = vmatpush1.msra.mxu0 0.0
    %300 = vmatprep.subr.mxu0 0.0
    %301 = vmatpush1.msra.mxu0 0.0
    %302 = vmatprep.subr.mxu0 0.0
    %303 = vmatpush1.msra.mxu0 0.0
    %304 = vmatprep.subr.mxu0 0.0
    %305 = vmatpush1.msra.mxu0 0.0
    %306 = vmatprep.subr.mxu0 0.0
    %307 = vmatpush1.msra.mxu0 0.0
    %308 = vmatprep.subr.mxu0 0.0
    %309 = vmatpush1.msra.mxu0 0.0
    %310 = vmatprep.subr.mxu0 0.0
    %311 = vmatpush1.msra.mxu0 0.0
    %312 = vmatprep.subr.mxu0 0.0
    %313 = vmatpush1.msra.mxu0 0.0
    %314 = vmatprep.subr.mxu0 0.0
    %315 = vmatpush1.msra.mxu0 0.0
    %316 = vmatprep.subr.mxu0 0.0
    %317 = vmatpush1.msra.mxu0 0.0
    %318 = vmatprep.subr.mxu0 0.0
    %319 = vmatpush1.msra.mxu0 0.0
    %320 = vmatprep.subr.mxu0 0.0
    %321 = vmatpush1.msra.mxu0 0.0
    %322 = vmatprep.subr.mxu0 0.0
    %323 = vmatpush1.msra.mxu0 0.0
    %324 = vmatprep.subr.mxu0 0.0
    %325 = vmatpush1.msra.mxu0 0.0
    %326 = vmatprep.subr.mxu0 0.0
    %327 = vmatpush1.msra.mxu0 0.0
    %328 = vmatprep.subr.mxu0 0.0
    %329 = vmatpush1.msra.mxu0 0.0
    %330 = vmatprep.subr.mxu0 0.0
    %331 = vmatpush1.msra.mxu0 0.0
    %332 = vmatprep.subr.mxu0 0.0
    %333 = vmatpush1.msra.mxu0 0.0
    %334 = vmatprep.subr.mxu0 0.0
    %335 = vmatpush1.msra.mxu0 0.0
    %336 = vmatprep.subr.mxu0 0.0
    %337 = vmatpush1.msra.mxu0 0.0
    %338 = vmatprep.subr.mxu0 0.0
    %339 = vmatpush1.msra.mxu0 0.0
    %340 = vmatprep.subr.mxu0 0.0
    %341 = vmatpush1.msra.mxu0 0.0
    %342 = vmatprep.subr.mxu0 0.0
    %343 = vmatpush1.msra.mxu0 0.0
    %344 = vmatprep.subr.mxu0 0.0
    %345 = vmatpush1.msra.mxu0 0.0
    %346 = vmatprep.subr.mxu0 0.0
    %347 = vmatpush1.msra.mxu0 0.0
    %348 = vmatprep.subr.mxu0 0.0
    %349 = vmatpush1.msra.mxu0 0.0
    %350 = vmatprep.subr.mxu0 0.0
    %351 = vmatpush1.msra.mxu0 0.0
    %352 = vmatprep.mubr.f32.mxu0 0.0
    %353 = vmatmul.mubr.f32.gmra.mrb[0].mxu0 %v73
    %v354 = vpop.f32.mrb[0].mxu0
    %v355 = vadd.f32 0.0, %v354
    %v356 = vpop.f32.mrb[0].mxu0
    %v357 = vadd.f32 0.0, %v356
    %358 = vdwg.mxu0
    %v367 = vcombine.low %v142, %v144
    %v368 = vcombine.low %v213, %v215
    %v369 = vcombine.low %v284, %v286
    %v370 = vcombine.low %v355, %v357
    %v372 = vunpack.c.l.s4 1966171168
    %v373 = vunpack.c.0.s8 %v372
    %v374 = vlaneseq
    %v375 = vshrl.u32 %v374, 7
    %v376 = vsub.s32 %v373, %v375
    %v377 = vrot.slane %v367, %v376
    %v379 = vunpack.c.l.s4 1966171168
    %v380 = vunpack.c.0.s8 %v379
    %v381 = vlaneseq
    %v382 = vshrl.u32 %v381, 7
    %v383 = vsub.s32 %v380, %v382
    %v384 = vrot.slane %v368, %v383
    %v386 = vunpack.c.l.s4 1966171168
    %v387 = vunpack.c.0.s8 %v386
    %v388 = vlaneseq
    %v389 = vshrl.u32 %v388, 7
    %v390 = vsub.s32 %v387, %v389
    %v391 = vrot.slane %v369, %v390
    %v393 = vunpack.c.l.s4 1966171168
    %v394 = vunpack.c.0.s8 %v393
    %v395 = vlaneseq
    %v396 = vshrl.u32 %v395, 7
    %v397 = vsub.s32 %v394, %v396
    %v398 = vrot.slane %v370, %v397
    %v399 = vcombine.low %v377, %v384
    %v400 = vcombine.low %v391, %v398
    %v402 = vunpack.c.l.s4 1966171168
    %v403 = vunpack.c.0.s8 %v402
    %v404 = vlaneseq
    %v405 = vshrl.u32 %v404, 7
    %v406 = vsub.s32 %v403, %v405
    %v407 = vrot.slane %v399, %v406
    %v409 = vunpack.c.l.s4 1966171168
    %v410 = vunpack.c.0.s8 %v409
    %v411 = vlaneseq
    %v412 = vshrl.u32 %v411, 7
    %v413 = vsub.s32 %v410, %v412
    %v414 = vrot.slane %v400, %v413
    %v415 = vcombine.low %v407, %v414
    %417 = vst [vmem:[#allocation7] sm:$0xff] %v415
    // Predicated region
    $region18: #{tpu_custom_call.1} parent=1 // pred_check
      _
    $region19: #{tpu_custom_call.1} parent=1 // pred_check_branch
      %419 = sbr.rel (0) target = $region21
    $region20: #{tpu_custom_call.1} parent=1 // pred_region
      %s421 = ssub.s32 128, 128
      %422 = vsyncadd [#allocation4], %s421
      %s424 = sshll.u32 [#allocation7], 4
      %s425 = int_to_ptr.vmem [resolvable:$true] %s424
      %427 = dma.vmem_to_hbm [thread:$0]  %s425, 128, %s2, [#allocation4]
    $region21: #{tpu_custom_call.1} parent=1 // pred_fallthru
      _
    // Predicated region
    $region22: #{tpu_custom_call.1} parent=1 // pred_check
      _
    $region23: #{tpu_custom_call.1} parent=1 // pred_check_branch
      %429 = sbr.rel (0) target = $region25
    $region24: #{tpu_custom_call.1} parent=1 // pred_region
      %430 = dma.done [#allocation4], 128
    $region25: #{tpu_custom_call.1} parent=1 // pred_fallthru
      _
    %431 = vsyncpa [#allocation3], 1
    %432 = vsyncpa [#allocation6], 1
    %433 = vsyncpa [#allocation4], 1

</llo_original>
